<compile_context>
chip_gen: v7x
topology: tpu7x:2x2x1
jax: 0.10.0
libtpu: 0.0.40
codegen_flags: <defaults>
</compile_context>

<pallas_src>
import functools

import jax
import jax.numpy as jnp
from jax import lax
from jax.experimental import pallas as pl
from jax.experimental.pallas import tpu as pltpu


def conv_lr2_kernel(x_ref, w_ref, b_ref, o_ref, *, matmul_dtype, num_chains):
    """Bidirectional column recurrence on one (W, TILE_BP, CC) tile.

    x_ref : (W, TILE_BP, CC)  input columns (f32), lane-packed channels
    w_ref : (CC, CC)          block-diagonal transposed center-tap weight
    b_ref : (1, CC)           lane-packed conv bias (f32)
    o_ref : (W, TILE_BP, CC)  output; also holds intermediate column states
    """
    w_cols, tile_bp, cc = x_ref.shape
    half = tile_bp // num_chains

    # Hoist loop-invariant operands out of both serial loops.  JAX does not
    # CSE broadcast_in_dim, so broadcast the bias once, not per step.
    wmat = w_ref[...]                                   # (CC, CC), matmul dtype
    bias = jnp.broadcast_to(b_ref[...], (half, cc))     # (half, CC), f32

    def step(s, residual):
        # MXU matmul in matmul_dtype, f32 accumulation; epilogue in f32.
        y = jnp.dot(s.astype(matmul_dtype), wmat,
                    preferred_element_type=jnp.float32)
        return jnp.maximum(y + bias, 0.0) + residual

    def chains_of(col):
        # Static sublane slices (half is a multiple of 8).
        return tuple(col[c * half:(c + 1) * half, :] for c in range(num_chains))

    # i == 0: fea_stack[0] = i_fea (no conv).
    col0 = x_ref[0]
    o_ref[0] = col0.astype(o_ref.dtype)
    carry0 = chains_of(col0)

    # Left-to-right pass.  Each sub-chain keeps its state in the loop carry
    # (vregs); the chains are independent, so chain B's matmul overlaps chain
    # A's VPU epilogue.  o_ref writes are side writes (not on the serial chain).
    def fwd(i, carry):
        resid = chains_of(x_ref[i])
        new = tuple(step(carry[c], resid[c]) for c in range(num_chains))
        o_ref[i] = jnp.concatenate(new, axis=0).astype(o_ref.dtype)
        return new

    carry = lax.fori_loop(1, w_cols, fwd, carry0)

    # Right-to-left pass; carry is s[pos+1], residual is the fwd-pass value.
    def bwd(j, carry):
        pos = w_cols - 2 - j
        resid = chains_of(o_ref[pos])
        new = tuple(step(carry[c], resid[c]) for c in range(num_chains))
        o_ref[pos] = jnp.concatenate(new, axis=0).astype(o_ref.dtype)
        return new

    lax.fori_loop(0, w_cols - 1, bwd, carry)


def _vmem_budget():
    """(pipeline budget bytes, vmem_limit_bytes) chosen per TPU generation."""
    cap = None
    try:
        cap = getattr(pltpu.get_tpu_info(), "vmem_capacity_bytes", None)
    except Exception:  # query unavailable (e.g. interpret mode) -> be safe
        cap = None
    if cap is None:
        return 20 * 1024 * 1024, 32 * 1024 * 1024     # unknown part: conservative
    if cap <= 64 * 1024 * 1024:                       # v7x-class: 64 MiB physical
        return 24 * 1024 * 1024, 48 * 1024 * 1024
    return 48 * 1024 * 1024, 96 * 1024 * 1024         # v5e / v6e: 128 MiB physical


def _pick_tile_b(w, cc, b_rows_packed, itemsize, budget_bytes):
    """Packed-row tile: multiple of 16 (two 8-aligned sub-chains), VMEM-capped.

    Pipeline VMEM ~= (x + o) * double buffer * W*TILE*CC*itemsize.
    Capped at 128 packed rows so each sub-chain carry stays <= 16 vregs.
    """
    per_row = 2 * 2 * w * cc * itemsize
    tile = (budget_bytes // per_row) // 16 * 16
    tile = max(16, min(int(tile), 128))
    b_ceil = pl.cdiv(b_rows_packed, 16) * 16
    tile = min(tile, b_ceil)
    # v7x megacore: ensure >= 2 grid steps so ("parallel",) shards across the
    # 2 TensorCores whenever the problem is big enough to split.
    if b_ceil // tile < 2 and b_ceil >= 32:
        tile = max(16, (b_ceil // 2) // 16 * 16)
    return tile


def conv_lr2_channels_last(x_wbc, conv_weight, conv_bias, *,
                           matmul_dtype=jnp.bfloat16, lane_pack=2):
    """convLR2 forward on channels-last data (preferred entry point).

    x_wbc: (W, B, C) with W = image width, B = N*H independent pixel rows,
           C = channels.  Returns (W, B, C) float32.
    Keeping the surrounding model in this layout avoids the two full-tensor
    HBM relayouts done by the NCHW wrapper below.
    """
    w, b_rows, c = x_wbc.shape

    # Width-1 column conv with padding 4 only uses the center tap.
    m = conv_weight[:, :, 0, 4]                      # (C_out, C_in)
    wt = m.T                                         # (C_in, C_out)

    # Lane packing for the 256-wide v6e/v7x MXU: pack `lane_pack` independent
    # pixel rows along lanes (free row-major reshape) and use a block-diagonal
    # weight; one full-width matmul per serial step.  lane_pack=1 for v5e.
    cc = lane_pack * c
    if lane_pack > 1:
        wt_big = jnp.kron(jnp.eye(lane_pack, dtype=wt.dtype), wt)   # (CC, CC)
    else:
        wt_big = wt
    wt_big = wt_big.astype(matmul_dtype)
    b_big = jnp.tile(conv_bias.reshape(1, c).astype(jnp.float32), (1, lane_pack))

    itemsize = jnp.dtype(jnp.float32).itemsize
    budget, vmem_limit = _vmem_budget()
    bp = pl.cdiv(b_rows, lane_pack)                  # packed rows
    tile_bp = _pick_tile_b(w, cc, bp, itemsize, budget)
    bp_pad = pl.cdiv(bp, tile_bp) * tile_bp
    b_pad = bp_pad * lane_pack

    x32 = x_wbc.astype(jnp.float32)
    if b_pad != b_rows:
        x32 = jnp.pad(x32, ((0, 0), (0, b_pad - b_rows), (0, 0)))
    xp = x32.reshape(w, bp_pad, cc)                  # free row-major lane-pack

    grid = (bp_pad // tile_bp,)

    cost = pl.CostEstimate(
        flops=int(4 * max(w - 1, 0) * bp_pad * cc * cc),     # 2*(W-1) matmuls
        transcendentals=0,
        bytes_accessed=int(2 * w * bp_pad * cc * itemsize
                           + cc * cc * jnp.dtype(matmul_dtype).itemsize),
    )

    out = pl.pallas_call(
        functools.partial(conv_lr2_kernel, matmul_dtype=matmul_dtype,
                          num_chains=2),
        out_shape=jax.ShapeDtypeStruct((w, bp_pad, cc), jnp.float32),
        grid=grid,
        in_specs=[
            pl.BlockSpec((w, tile_bp, cc), lambda i: (0, i, 0)),   # x tile
            pl.BlockSpec((cc, cc), lambda i: (0, 0)),              # weight (resident)
            pl.BlockSpec((1, cc), lambda i: (0, 0)),               # bias (resident)
        ],
        out_specs=pl.BlockSpec((w, tile_bp, cc), lambda i: (0, i, 0)),
        input_output_aliases={0: 0},                               # x/o share HBM
        compiler_params=pltpu.CompilerParams(
            dimension_semantics=("parallel",),
            vmem_limit_bytes=vmem_limit,
        ),
        cost_estimate=cost,
    )(xp, wt_big, b_big)

    return out.reshape(w, b_pad, c)[:, :b_rows, :]


def conv_lr2(fea, conv_weight, conv_bias, *, matmul_dtype=jnp.bfloat16,
             lane_pack=2):
    """Module-compatible entry point: fea (N, C, H, W) -> (N, C, H, W)."""
    n, c, h, w = fea.shape
    # TODO(synk): these two full-tensor relayouts (NCHW -> (W, N*H, C) and the
    # inverse) are each a full HBM read+write and together exceed the kernel's
    # own traffic; keep activations channels-last in the surrounding model and
    # call conv_lr2_channels_last() directly to eliminate them.
    x_wbc = jnp.transpose(fea, (3, 0, 2, 1)).reshape(w, n * h, c)
    out_wbc = conv_lr2_channels_last(x_wbc, conv_weight, conv_bias,
                                     matmul_dtype=matmul_dtype,
                                     lane_pack=lane_pack)
    return jnp.transpose(out_wbc.reshape(w, n, h, c), (1, 3, 2, 0))


def conv_lr2_ref(fea, conv_weight, conv_bias):
    """Pure-JAX reference mirroring the PyTorch loop semantics (f32)."""
    n, c, h, w = fea.shape
    m = conv_weight[:, :, 0, 4]

    def f(x):  # x: (N, C, H)
        y = jnp.einsum("oc,nch->noh", m, x) + conv_bias[None, :, None]
        return jnp.maximum(y, 0.0)

    cols = [fea[:, :, :, i] for i in range(w)]
    s = [None] * w
    s[0] = cols[0]
    for i in range(1, w):
        s[i] = f(s[i - 1]) + cols[i]
    for j in range(w - 1):
        pos = w - 2 - j
        s[pos] = f(s[pos + 1]) + s[pos]
    return jnp.stack(s, axis=3)


# TODO(synk): the stride > 1 branch of convLR2.forward (grouped-column conv
# with a true width-9 receptive field) is not exercised by the default
# stride=1 module and is not implemented here.

if __name__ == "__main__":
    N, C, H, W = 2, 128, 8, 8  # small demo shapes; C lane-aligned (128)

    key = jax.random.PRNGKey(0)
    k_x, k_w, k_b = jax.random.split(key, 3)

    fea = jax.random.normal(k_x, (N, C, H, W), dtype=jnp.float32)
    # Deterministic synthetic Conv2d(C, C, (1, 9)) parameters; small scale so
    # the depth-2W recurrence stays numerically tame.
    conv_weight = 0.02 * jax.random.normal(k_w, (C, C, 1, 9), dtype=jnp.float32)
    conv_bias = 0.01 * jax.random.normal(k_b, (C,), dtype=jnp.float32)

    # Production path (v6e/v7x): bf16 MXU operands + 2-way lane packing.
    run_bf16 = jax.jit(functools.partial(conv_lr2, matmul_dtype=jnp.bfloat16,
                                         lane_pack=2))
    # Full-precision path for strict validation.
    run_f32 = jax.jit(functools.partial(conv_lr2, matmul_dtype=jnp.float32,
                                        lane_pack=2))

    out_bf16 = run_bf16(fea, conv_weight, conv_bias)
    out_f32 = run_f32(fea, conv_weight, conv_bias)
    out_bf16, out_f32 = jax.block_until_ready((out_bf16, out_f32))

    ref = conv_lr2_ref(fea, conv_weight, conv_bias)
    assert out_f32.shape == (N, C, H, W)
    assert out_bf16.shape == (N, C, H, W)
    assert jnp.allclose(out_f32, ref, rtol=1e-4, atol=1e-4), "f32 mismatch vs reference"
    # NOTE: bf16 carries the recurrence state through 2(W-1) rounded steps;
    # re-validate at production W before trusting the bf16 path there.
    assert jnp.allclose(out_bf16, ref, rtol=5e-2, atol=5e-2), "bf16 mismatch vs reference"

    # Ragged shape: exercises B-padding and the unpacked (lane_pack=1, v5e) path.
    N2, H2, W2 = 1, 5, 6
    fea2 = jax.random.normal(key, (N2, C, H2, W2), dtype=jnp.float32)
    out2 = jax.block_until_ready(
        conv_lr2(fea2, conv_weight, conv_bias, matmul_dtype=jnp.float32,
                 lane_pack=1))
    ref2 = conv_lr2_ref(fea2, conv_weight, conv_bias)
    assert jnp.allclose(out2, ref2, rtol=1e-4, atol=1e-4), "lane_pack=1 mismatch"

    print("KERNEL_OK")
</pallas_src>

<mosaic_0001>
module attributes {stable_mosaic.version = 11 : i64} {
  func.func @conv_lr2_kernel(%arg0: i32, %arg1: memref<8x16x256xf32, #tpu.memory_space<vmem>>, %arg2: memref<256x256xbf16, #tpu.memory_space<vmem>>, %arg3: memref<1x256xf32, #tpu.memory_space<vmem>>, %arg4: memref<8x16x256xf32, #tpu.memory_space<vmem>>) attributes {dimension_semantics = [#tpu.dimension_semantics<parallel>], iteration_bounds = array<i64: 1>, scalar_prefetch = 0 : i64, scratch_operands = 0 : i64, tpu.core_type = #tpu.core_type<tc>, window_params = [{transform_indices = @transform_0, window_bounds = array<i64: 8, 16, 256>}, {pipeline_mode = #tpu.pipeline_mode<synchronous>, transform_indices = @transform_1, window_bounds = array<i64: 256, 256>}, {pipeline_mode = #tpu.pipeline_mode<synchronous>, transform_indices = @transform_2, window_bounds = array<i64: 1, 256>}, {transform_indices = @transform_3, window_bounds = array<i64: 8, 16, 256>}]} {
    %c0 = arith.constant 0 : index
    %c0_0 = arith.constant 0 : index
    %0 = vector.load %arg2[%c0, %c0_0] : memref<256x256xbf16, #tpu.memory_space<vmem>>, vector<256x256xbf16>
    %c0_1 = arith.constant 0 : index
    %c0_2 = arith.constant 0 : index
    %1 = vector.load %arg3[%c0_1, %c0_2] : memref<1x256xf32, #tpu.memory_space<vmem>>, vector<1x256xf32>
    %2 = vector.shape_cast %1 : vector<1x256xf32> to vector<1x256xf32>
    %3 = vector.broadcast %2 : vector<1x256xf32> to vector<8x256xf32>
    %c0_3 = arith.constant 0 : index
    %c0_4 = arith.constant 0 : index
    %c0_5 = arith.constant 0 : index
    %4 = vector.load %arg1[%c0_3, %c0_4, %c0_5] : memref<8x16x256xf32, #tpu.memory_space<vmem>>, vector<1x16x256xf32>
    %5 = vector.shape_cast %4 : vector<1x16x256xf32> to vector<16x256xf32>
    %c0_6 = arith.constant 0 : index
    %c0_7 = arith.constant 0 : index
    %c0_8 = arith.constant 0 : index
    %6 = vector.load %arg4[%c0_6, %c0_7, %c0_8] : memref<8x16x256xf32, #tpu.memory_space<vmem>>, vector<1x16x256xf32>
    %7 = vector.shape_cast %6 : vector<1x16x256xf32> to vector<16x256xf32>
    %8 = vector.shape_cast %5 : vector<16x256xf32> to vector<1x16x256xf32>
    tpu.vector_store %arg4[%c0_6, %c0_7, %c0_8], %8 {strides = array<i32>} : memref<8x16x256xf32, #tpu.memory_space<vmem>>, vector<1x16x256xf32>,
    %9 = vector.extract_strided_slice %5 {offsets = [0, 0], sizes = [8, 256], strides = [1, 1]} : vector<16x256xf32> to vector<8x256xf32>
    %10 = vector.extract_strided_slice %5 {offsets = [8, 0], sizes = [8, 256], strides = [1, 1]} : vector<16x256xf32> to vector<8x256xf32>
    %c1_i32 = arith.constant 1 : i32
    %c7_i32 = arith.constant 7 : i32
    %11 = arith.addi %c1_i32, %c7_i32 : i32
    %c1_i32_9 = arith.constant 1 : i32
    %12:2 = scf.for %arg5 = %c1_i32 to %11 step %c1_i32_9 iter_args(%arg6 = %9, %arg7 = %10) -> (vector<8x256xf32>, vector<8x256xf32>)  : i32 {
      %15 = arith.index_cast %arg5 : i32 to index
      %c0_14 = arith.constant 0 : index
      %c0_15 = arith.constant 0 : index
      %16 = vector.load %arg1[%15, %c0_14, %c0_15] : memref<8x16x256xf32, #tpu.memory_space<vmem>>, vector<1x16x256xf32>
      %17 = vector.shape_cast %16 : vector<1x16x256xf32> to vector<16x256xf32>
      %18 = vector.extract_strided_slice %17 {offsets = [0, 0], sizes = [8, 256], strides = [1, 1]} : vector<16x256xf32> to vector<8x256xf32>
      %19 = vector.extract_strided_slice %17 {offsets = [8, 0], sizes = [8, 256], strides = [1, 1]} : vector<16x256xf32> to vector<8x256xf32>
      %20 = arith.truncf %arg6 : vector<8x256xf32> to vector<8x256xbf16>
      %cst = arith.constant dense<0.000000e+00> : vector<8x256xf32>
      %21 = tpu.matmul %20, %0, %cst {dimension_numbers = #tpu.dot_dimension_numbers<[1], [0], [0], [1], [0, 0, 1, 1], [], []>} : vector<8x256xbf16>, vector<256x256xbf16>, vector<8x256xf32> -> vector<8x256xf32>
      %22 = arith.addf %21, %3 : vector<8x256xf32>
      %cst_16 = arith.constant 0.000000e+00 : f32
      %23 = vector.broadcast %cst_16 : f32 to vector<8x256xf32>
      %24 = arith.maximumf %22, %23 : vector<8x256xf32>
      %25 = arith.addf %24, %18 : vector<8x256xf32>
      %26 = arith.truncf %arg7 : vector<8x256xf32> to vector<8x256xbf16>
      %cst_17 = arith.constant dense<0.000000e+00> : vector<8x256xf32>
      %27 = tpu.matmul %26, %0, %cst_17 {dimension_numbers = #tpu.dot_dimension_numbers<[1], [0], [0], [1], [0, 0, 1, 1], [], []>} : vector<8x256xbf16>, vector<256x256xbf16>, vector<8x256xf32> -> vector<8x256xf32>
      %28 = arith.addf %27, %3 : vector<8x256xf32>
      %cst_18 = arith.constant 0.000000e+00 : f32
      %29 = vector.broadcast %cst_18 : f32 to vector<8x256xf32>
      %30 = arith.maximumf %28, %29 : vector<8x256xf32>
      %31 = arith.addf %30, %19 : vector<8x256xf32>
      %32 = tpu.concatenate %25, %31 in 0 : vector<8x256xf32>, vector<8x256xf32> -> vector<16x256xf32>
      %33 = arith.index_cast %arg5 : i32 to index
      %c0_19 = arith.constant 0 : index
      %c0_20 = arith.constant 0 : index
      %34 = vector.load %arg4[%33, %c0_19, %c0_20] : memref<8x16x256xf32, #tpu.memory_space<vmem>>, vector<1x16x256xf32>
      %35 = vector.shape_cast %34 : vector<1x16x256xf32> to vector<16x256xf32>
      %36 = vector.shape_cast %32 : vector<16x256xf32> to vector<1x16x256xf32>
      tpu.vector_store %arg4[%33, %c0_19, %c0_20], %36 {strides = array<i32>} : memref<8x16x256xf32, #tpu.memory_space<vmem>>, vector<1x16x256xf32>,
      scf.yield %25, %31 : vector<8x256xf32>, vector<8x256xf32>
    }
    %c7_i32_10 = arith.constant 7 : i32
    %c0_i32 = arith.constant 0 : i32
    %c7_i32_11 = arith.constant 7 : i32
    %13 = arith.addi %c0_i32, %c7_i32_11 : i32
    %c1_i32_12 = arith.constant 1 : i32
    %14:2 = scf.for %arg5 = %c0_i32 to %13 step %c1_i32_12 iter_args(%arg6 = %12#0, %arg7 = %12#1) -> (vector<8x256xf32>, vector<8x256xf32>)  : i32 {
      %c6_i32 = arith.constant 6 : i32
      %15 = arith.subi %c6_i32, %arg5 : i32
      %16 = arith.index_cast %15 : i32 to index
      %c0_14 = arith.constant 0 : index
      %c0_15 = arith.constant 0 : index
      %17 = vector.load %arg4[%16, %c0_14, %c0_15] : memref<8x16x256xf32, #tpu.memory_space<vmem>>, vector<1x16x256xf32>
      %18 = vector.shape_cast %17 : vector<1x16x256xf32> to vector<16x256xf32>
      %19 = vector.extract_strided_slice %18 {offsets = [0, 0], sizes = [8, 256], strides = [1, 1]} : vector<16x256xf32> to vector<8x256xf32>
      %20 = vector.extract_strided_slice %18 {offsets = [8, 0], sizes = [8, 256], strides = [1, 1]} : vector<16x256xf32> to vector<8x256xf32>
      %21 = arith.truncf %arg6 : vector<8x256xf32> to vector<8x256xbf16>
      %cst = arith.constant dense<0.000000e+00> : vector<8x256xf32>
      %22 = tpu.matmul %21, %0, %cst {dimension_numbers = #tpu.dot_dimension_numbers<[1], [0], [0], [1], [0, 0, 1, 1], [], []>} : vector<8x256xbf16>, vector<256x256xbf16>, vector<8x256xf32> -> vector<8x256xf32>
      %23 = arith.addf %22, %3 : vector<8x256xf32>
      %cst_16 = arith.constant 0.000000e+00 : f32
      %24 = vector.broadcast %cst_16 : f32 to vector<8x256xf32>
      %25 = arith.maximumf %23, %24 : vector<8x256xf32>
      %26 = arith.addf %25, %19 : vector<8x256xf32>
      %27 = arith.truncf %arg7 : vector<8x256xf32> to vector<8x256xbf16>
      %cst_17 = arith.constant dense<0.000000e+00> : vector<8x256xf32>
      %28 = tpu.matmul %27, %0, %cst_17 {dimension_numbers = #tpu.dot_dimension_numbers<[1], [0], [0], [1], [0, 0, 1, 1], [], []>} : vector<8x256xbf16>, vector<256x256xbf16>, vector<8x256xf32> -> vector<8x256xf32>
      %29 = arith.addf %28, %3 : vector<8x256xf32>
      %cst_18 = arith.constant 0.000000e+00 : f32
      %30 = vector.broadcast %cst_18 : f32 to vector<8x256xf32>
      %31 = arith.maximumf %29, %30 : vector<8x256xf32>
      %32 = arith.addf %31, %20 : vector<8x256xf32>
      %33 = tpu.concatenate %26, %32 in 0 : vector<8x256xf32>, vector<8x256xf32> -> vector<16x256xf32>
      %34 = arith.index_cast %15 : i32 to index
      %c0_19 = arith.constant 0 : index
      %c0_20 = arith.constant 0 : index
      %35 = vector.load %arg4[%34, %c0_19, %c0_20] : memref<8x16x256xf32, #tpu.memory_space<vmem>>, vector<1x16x256xf32>
      %36 = vector.shape_cast %35 : vector<1x16x256xf32> to vector<16x256xf32>
      %37 = vector.shape_cast %33 : vector<16x256xf32> to vector<1x16x256xf32>
      tpu.vector_store %arg4[%34, %c0_19, %c0_20], %37 {strides = array<i32>} : memref<8x16x256xf32, #tpu.memory_space<vmem>>, vector<1x16x256xf32>,
      scf.yield %26, %32 : vector<8x256xf32>, vector<8x256xf32>
    }
    %c7_i32_13 = arith.constant 7 : i32
    return
  }
  func.func @transform_0(%arg0: i32) -> (i32, i32, i32) {
    %c0_i32 = arith.constant 0 : i32
    %c0_i32_0 = arith.constant 0 : i32
    %c0_i32_1 = arith.constant 0 : i32
    return %c0_i32, %arg0, %c0_i32_0 : i32, i32, i32
  }
  func.func @transform_1(%arg0: i32) -> (i32, i32) {
    %c0_i32 = arith.constant 0 : i32
    %c0_i32_0 = arith.constant 0 : i32
    %c0_i32_1 = arith.constant 0 : i32
    return %c0_i32, %c0_i32_0 : i32, i32
  }
  func.func @transform_2(%arg0: i32) -> (i32, i32) {
    %c0_i32 = arith.constant 0 : i32
    %c0_i32_0 = arith.constant 0 : i32
    %c0_i32_1 = arith.constant 0 : i32
    return %c0_i32, %c0_i32_0 : i32, i32
  }
  func.func @transform_3(%arg0: i32) -> (i32, i32, i32) {
    %c0_i32 = arith.constant 0 : i32
    %c0_i32_0 = arith.constant 0 : i32
    %c0_i32_1 = arith.constant 0 : i32
    return %c0_i32, %arg0, %c0_i32_0 : i32, i32, i32
  }
}

</mosaic_0001>

<llo_original>
// kernel: conv_lr2.1
$region0: #{conv_lr2.1}
  #allocation0 [shape = 'u32[]', space=smem, size = 0x4, offset = 0x4, fixed_abs, tag = 'smem constant byte address 0x4 - core index']
  #allocation1 [shape = 'u32[144,128]{1,0:T(1,128)}', space=vmem, size = 0x12000, scoped, tag = 'internal scratch']
  %s0 = inlined_call_operand.vmem [shape: f32[8,16,256], index: 0, kind: input, shape index: {}, may-alias: {0,3}]
  %s1 = inlined_call_operand.vmem [shape: bf16[256,256], index: 1, kind: input, shape index: {}]
  %s2 = inlined_call_operand.vmem [shape: f32[1,256], index: 2, kind: input, shape index: {}]
  %s3 = inlined_call_operand.vmem [shape: f32[8,16,256], index: 3, kind: output, shape index: {}, may-alias: {0,3}]
  %s4 = sld [smem:[#allocation0]]
  $region36: #{conv_lr2.1} parent=0
    _
  %s6 = ssub.s32 1, %s4
  %s7 = scalar_select 0, %s6, %s4
  // Predicated region
  $region2: #{conv_lr2.1} parent=0 // pred_check
    _
  $region3: #{conv_lr2.1} parent=0 // pred_check_branch
    %9 = sbr.rel (0) target = $region5
  $region4: #{conv_lr2.1} parent=0 // pred_region
    _
  $region5: #{conv_lr2.1} parent=0 // pred_fallthru
    _
  // Predicated region
  $region6: #{conv_lr2.1} parent=0 // pred_check
    _
  $region7: #{conv_lr2.1} parent=0 // pred_check_branch
    %11 = sbr.rel (0) target = $region9
  $region8: #{conv_lr2.1} parent=0 // pred_region
    _
  $region9: #{conv_lr2.1} parent=0 // pred_fallthru
    _
  // Predicated region
  $region10: #{conv_lr2.1} parent=0 // pred_check
    _
  $region11: #{conv_lr2.1} parent=0 // pred_check_branch
    %13 = sbr.rel (0) target = $region13
  $region12: #{conv_lr2.1} parent=0 // pred_region
    _
  $region13: #{conv_lr2.1} parent=0 // pred_fallthru
    _
  %v14 = vld [vmem:[%s1] sm:$0xff]
  %v15 = vld [vmem:[%s1 + $0x8] sm:$0xff]
  %v16 = vld [vmem:[%s1 + $0x10] sm:$0xff]
  %v17 = vld [vmem:[%s1 + $0x18] sm:$0xff]
  %v18 = vld [vmem:[%s1 + $0x20] sm:$0xff]
  %v19 = vld [vmem:[%s1 + $0x28] sm:$0xff]
  %v20 = vld [vmem:[%s1 + $0x30] sm:$0xff]
  %v21 = vld [vmem:[%s1 + $0x38] sm:$0xff]
  %v22 = vld [vmem:[%s1 + $0x40] sm:$0xff]
  %v23 = vld [vmem:[%s1 + $0x48] sm:$0xff]
  %v24 = vld [vmem:[%s1 + $0x50] sm:$0xff]
  %v25 = vld [vmem:[%s1 + $0x58] sm:$0xff]
  %v26 = vld [vmem:[%s1 + $0x60] sm:$0xff]
  %v27 = vld [vmem:[%s1 + $0x68] sm:$0xff]
  %v28 = vld [vmem:[%s1 + $0x70] sm:$0xff]
  %v29 = vld [vmem:[%s1 + $0x78] sm:$0xff]
  %v30 = vld [vmem:[%s1 + $0x80] sm:$0xff]
  %v31 = vld [vmem:[%s1 + $0x88] sm:$0xff]
  %v32 = vld [vmem:[%s1 + $0x90] sm:$0xff]
  %v33 = vld [vmem:[%s1 + $0x98] sm:$0xff]
  %v34 = vld [vmem:[%s1 + $0xa0] sm:$0xff]
  %v35 = vld [vmem:[%s1 + $0xa8] sm:$0xff]
  %v36 = vld [vmem:[%s1 + $0xb0] sm:$0xff]
  %v37 = vld [vmem:[%s1 + $0xb8] sm:$0xff]
  %v38 = vld [vmem:[%s1 + $0xc0] sm:$0xff]
  %v39 = vld [vmem:[%s1 + $0xc8] sm:$0xff]
  %v40 = vld [vmem:[%s1 + $0xd0] sm:$0xff]
  %v41 = vld [vmem:[%s1 + $0xd8] sm:$0xff]
  %v42 = vld [vmem:[%s1 + $0xe0] sm:$0xff]
  %v43 = vld [vmem:[%s1 + $0xe8] sm:$0xff]
  %v44 = vld [vmem:[%s1 + $0xf0] sm:$0xff]
  %v45 = vld [vmem:[%s1 + $0xf8] sm:$0xff]
  %v46 = vld [vmem:[%s2] sm:$0x3]
  %v48 = vlaneseq
  %v49 = vshrl.u32 %v48, 7
  %v50 = vsub.s32 0, %v49
  %v51 = vrot.slane %v46, %v50
  %v52 = vlaneseq
  %v53 = vshrl.u32 %v52, 7
  %v54 = vsub.s32 1, %v53
  %v55 = vrot.slane %v46, %v54
  %v58 = vld [vmem:[%s0] sm:$0xff]
  %v59 = vld [vmem:[%s0 + $0x8] sm:$0xff]
  %v60 = vld [vmem:[%s0 + $0x10] sm:$0xff]
  %v61 = vld [vmem:[%s0 + $0x18] sm:$0xff]
  %62 = vst [vmem:[%s3] sm:$0xff] %v58
  %63 = vst [vmem:[%s3 + $0x8] sm:$0xff] %v59
  %64 = vst [vmem:[%s3 + $0x10] sm:$0xff] %v60
  %65 = vst [vmem:[%s3 + $0x18] sm:$0xff] %v61
  loop: start=1, step=1, limit=8
  $region14: #{conv_lr2.1} parent=0 // loop_pre_header
    _
  $region15: #{conv_lr2.1} parent=0 // loop_header
    %s67 = sphi 1, %s71
    %p68 = scmp.ge.s32.totalorder %s67, 8
    %v72 = vphi %v58, %v288
    %v73 = vphi %v59, %v289
    %v74 = vphi %v60, %v335
    %v75 = vphi %v61, %v336
  $region16: #{conv_lr2.1} parent=0 // loop_header_branch
    %70 = sbr.rel (%p68) target = $region20
  $region17: #{conv_lr2.1} parent=0 // loop_body
    %s76 = smul.u32 %s67, 4
    %s77 = smul.addr %s76, 8
    %s78 = scalar_lea.vmem %s0, %s77
    %v79 = vld [vmem:[%s78] sm:$0xff]
    %v80 = vld [vmem:[%s78 + $0x8] sm:$0xff]
    %v81 = vld [vmem:[%s78 + $0x10] sm:$0xff]
    %v82 = vld [vmem:[%s78 + $0x18] sm:$0xff]
    %v83 = vpack.c.bf16 %v72, %v72
    %v84 = vpack.c.bf16 %v73, %v73
    %v117 = vunpack.c.l.b16 %v14
    %v118 = vunpack.c.h.b16 %v14
    %v119 = vunpack.c.l.b16 %v15
    %v120 = vunpack.c.h.b16 %v15
    %v121 = vunpack.c.l.b16 %v16
    %v122 = vunpack.c.h.b16 %v16
    %v123 = vunpack.c.l.b16 %v17
    %v124 = vunpack.c.h.b16 %v17
    %v125 = vunpack.c.l.b16 %v18
    %v126 = vunpack.c.h.b16 %v18
    %v127 = vunpack.c.l.b16 %v19
    %v128 = vunpack.c.h.b16 %v19
    %v129 = vunpack.c.l.b16 %v20
    %v130 = vunpack.c.h.b16 %v20
    %v131 = vunpack.c.l.b16 %v21
    %v132 = vunpack.c.h.b16 %v21
    %v133 = vunpack.c.l.b16 %v22
    %v134 = vunpack.c.h.b16 %v22
    %v135 = vunpack.c.l.b16 %v23
    %v136 = vunpack.c.h.b16 %v23
    %v137 = vunpack.c.l.b16 %v24
    %v138 = vunpack.c.h.b16 %v24
    %v139 = vunpack.c.l.b16 %v25
    %v140 = vunpack.c.h.b16 %v25
    %v141 = vunpack.c.l.b16 %v26
    %v142 = vunpack.c.h.b16 %v26
    %v143 = vunpack.c.l.b16 %v27
    %v144 = vunpack.c.h.b16 %v27
    %v145 = vunpack.c.l.b16 %v28
    %v146 = vunpack.c.h.b16 %v28
    %v147 = vunpack.c.l.b16 %v29
    %v148 = vunpack.c.h.b16 %v29
    %v149 = vunpack.c.l.b16 %v30
    %v150 = vunpack.c.h.b16 %v30
    %v151 = vunpack.c.l.b16 %v31
    %v152 = vunpack.c.h.b16 %v31
    %v153 = vunpack.c.l.b16 %v32
    %v154 = vunpack.c.h.b16 %v32
    %v155 = vunpack.c.l.b16 %v33
    %v156 = vunpack.c.h.b16 %v33
    %v157 = vunpack.c.l.b16 %v34
    %v158 = vunpack.c.h.b16 %v34
    %v159 = vunpack.c.l.b16 %v35
    %v160 = vunpack.c.h.b16 %v35
    %v161 = vunpack.c.l.b16 %v36
    %v162 = vunpack.c.h.b16 %v36
    %v163 = vunpack.c.l.b16 %v37
    %v164 = vunpack.c.h.b16 %v37
    %v165 = vunpack.c.l.b16 %v38
    %v166 = vunpack.c.h.b16 %v38
    %v167 = vunpack.c.l.b16 %v39
    %v168 = vunpack.c.h.b16 %v39
    %v169 = vunpack.c.l.b16 %v40
    %v170 = vunpack.c.h.b16 %v40
    %v171 = vunpack.c.l.b16 %v41
    %v172 = vunpack.c.h.b16 %v41
    %v173 = vunpack.c.l.b16 %v42
    %v174 = vunpack.c.h.b16 %v42
    %v175 = vunpack.c.l.b16 %v43
    %v176 = vunpack.c.h.b16 %v43
    %v177 = vunpack.c.l.b16 %v44
    %v178 = vunpack.c.h.b16 %v44
    %v179 = vunpack.c.l.b16 %v45
    %v180 = vunpack.c.h.b16 %v45
    %v181 = vpack.c.b16 %v119, %v117
    %v182 = vpack.c.b16 %v120, %v118
    %v183 = vpack.c.b16 %v123, %v121
    %v184 = vpack.c.b16 %v124, %v122
    %v185 = vpack.c.b16 %v127, %v125
    %v186 = vpack.c.b16 %v128, %v126
    %v187 = vpack.c.b16 %v131, %v129
    %v188 = vpack.c.b16 %v132, %v130
    %v189 = vpack.c.b16 %v135, %v133
    %v190 = vpack.c.b16 %v136, %v134
    %v191 = vpack.c.b16 %v139, %v137
    %v192 = vpack.c.b16 %v140, %v138
    %v193 = vpack.c.b16 %v143, %v141
    %v194 = vpack.c.b16 %v144, %v142
    %v195 = vpack.c.b16 %v147, %v145
    %v196 = vpack.c.b16 %v148, %v146
    %v197 = vpack.c.b16 %v151, %v149
    %v198 = vpack.c.b16 %v152, %v150
    %v199 = vpack.c.b16 %v155, %v153
    %v200 = vpack.c.b16 %v156, %v154
    %v201 = vpack.c.b16 %v159, %v157
    %v202 = vpack.c.b16 %v160, %v158
    %v203 = vpack.c.b16 %v163, %v161
    %v204 = vpack.c.b16 %v164, %v162
    %v205 = vpack.c.b16 %v167, %v165
    %v206 = vpack.c.b16 %v168, %v166
    %v207 = vpack.c.b16 %v171, %v169
    %v208 = vpack.c.b16 %v172, %v170
    %v209 = vpack.c.b16 %v175, %v173
    %v210 = vpack.c.b16 %v176, %v174
    %v211 = vpack.c.b16 %v179, %v177
    %v212 = vpack.c.b16 %v180, %v178
    %245 = vmatprep.subr.bf16.mxu0 %v182
    %246 = vmatpush1.bf16.msra.mxu0 %v181
    %247 = vmatprep.subr.bf16.mxu0 %v184
    %248 = vmatpush1.bf16.msra.mxu0 %v183
    %249 = vmatprep.subr.bf16.mxu0 %v186
    %250 = vmatpush1.bf16.msra.mxu0 %v185
    %251 = vmatprep.subr.bf16.mxu0 %v188
    %252 = vmatpush1.bf16.msra.mxu0 %v187
    %253 = vmatprep.subr.bf16.mxu0 %v190
    %254 = vmatpush1.bf16.msra.mxu0 %v189
    %255 = vmatprep.subr.bf16.mxu0 %v192
    %256 = vmatpush1.bf16.msra.mxu0 %v191
    %257 = vmatprep.subr.bf16.mxu0 %v194
    %258 = vmatpush1.bf16.msra.mxu0 %v193
    %259 = vmatprep.subr.bf16.mxu0 %v196
    %260 = vmatpush1.bf16.msra.mxu0 %v195
    %261 = vmatprep.subr.bf16.mxu0 %v198
    %262 = vmatpush1.bf16.msra.mxu0 %v197
    %263 = vmatprep.subr.bf16.mxu0 %v200
    %264 = vmatpush1.bf16.msra.mxu0 %v199
    %265 = vmatprep.subr.bf16.mxu0 %v202
    %266 = vmatpush1.bf16.msra.mxu0 %v201
    %267 = vmatprep.subr.bf16.mxu0 %v204
    %268 = vmatpush1.bf16.msra.mxu0 %v203
    %269 = vmatprep.subr.bf16.mxu0 %v206
    %270 = vmatpush1.bf16.msra.mxu0 %v205
    %271 = vmatprep.subr.bf16.mxu0 %v208
    %272 = vmatpush1.bf16.msra.mxu0 %v207
    %273 = vmatprep.subr.bf16.mxu0 %v210
    %274 = vmatpush1.bf16.msra.mxu0 %v209
    %275 = vmatprep.subr.bf16.mxu0 %v212
    %276 = vmatpush1.bf16.msra.mxu0 %v211
    %277 = vmatprep.mubr.bf16.mxu0 %v84
    %278 = vmatmul.mubr.bf16.gmra.mrb[0].mxu0 %v83
    %v279 = vpop.f32.mrb[0].mxu0
    %v280 = vadd.f32 %v51, %v279
    %v281 = vpop.f32.mrb[0].mxu0
    %v282 = vadd.f32 %v55, %v281
    %v283 = vpop.f32.mrb[0].mxu0
    %v284 = vpop.f32.mrb[0].mxu0
    %285 = vdwg.mxu0
    %v286 = vmax.f32 %v280, 0.0
    %v287 = vmax.f32 %v282, 0.0
    %v288 = vadd.f32 %v286, %v79
    %v289 = vadd.f32 %v287, %v80
    %v290 = vpack.c.bf16 %v74, %v74
    %v291 = vpack.c.bf16 %v75, %v75
    %292 = vmatprep.subr.bf16.mxu0 %v182
    %293 = vmatpush1.bf16.msra.mxu0 %v181
    %294 = vmatprep.subr.bf16.mxu0 %v184
    %295 = vmatpush1.bf16.msra.mxu0 %v183
    %296 = vmatprep.subr.bf16.mxu0 %v186
    %297 = vmatpush1.bf16.msra.mxu0 %v185
    %298 = vmatprep.subr.bf16.mxu0 %v188
    %299 = vmatpush1.bf16.msra.mxu0 %v187
    %300 = vmatprep.subr.bf16.mxu0 %v190
    %301 = vmatpush1.bf16.msra.mxu0 %v189
    %302 = vmatprep.subr.bf16.mxu0 %v192
    %303 = vmatpush1.bf16.msra.mxu0 %v191
    %304 = vmatprep.subr.bf16.mxu0 %v194
    %305 = vmatpush1.bf16.msra.mxu0 %v193
    %306 = vmatprep.subr.bf16.mxu0 %v196
    %307 = vmatpush1.bf16.msra.mxu0 %v195
    %308 = vmatprep.subr.bf16.mxu0 %v198
    %309 = vmatpush1.bf16.msra.mxu0 %v197
    %310 = vmatprep.subr.bf16.mxu0 %v200
    %311 = vmatpush1.bf16.msra.mxu0 %v199
    %312 = vmatprep.subr.bf16.mxu0 %v202
    %313 = vmatpush1.bf16.msra.mxu0 %v201
    %314 = vmatprep.subr.bf16.mxu0 %v204
    %315 = vmatpush1.bf16.msra.mxu0 %v203
    %316 = vmatprep.subr.bf16.mxu0 %v206
    %317 = vmatpush1.bf16.msra.mxu0 %v205
    %318 = vmatprep.subr.bf16.mxu0 %v208
    %319 = vmatpush1.bf16.msra.mxu0 %v207
    %320 = vmatprep.subr.bf16.mxu0 %v210
    %321 = vmatpush1.bf16.msra.mxu0 %v209
    %322 = vmatprep.subr.bf16.mxu0 %v212
    %323 = vmatpush1.bf16.msra.mxu0 %v211
    %324 = vmatprep.mubr.bf16.mxu0 %v291
    %325 = vmatmul.mubr.bf16.gmra.mrb[0].mxu0 %v290
    %v326 = vpop.f32.mrb[0].mxu0
    %v327 = vadd.f32 %v51, %v326
    %v328 = vpop.f32.mrb[0].mxu0
    %v329 = vadd.f32 %v55, %v328
    %v330 = vpop.f32.mrb[0].mxu0
    %v331 = vpop.f32.mrb[0].mxu0
    %332 = vdwg.mxu0
    %v333 = vmax.f32 %v327, 0.0
    %v334 = vmax.f32 %v329, 0.0
    %v335 = vadd.f32 %v333, %v81
    %v336 = vadd.f32 %v334, %v82
    %s337 = smul.addr %s76, 8
    %s338 = scalar_lea.vmem %s3, %s337
    %339 = vst [vmem:[%s338] sm:$0xff] %v288
    %340 = vst [vmem:[%s338 + $0x8] sm:$0xff] %v289
    %341 = vst [vmem:[%s338 + $0x10] sm:$0xff] %v335
    %342 = vst [vmem:[%s338 + $0x18] sm:$0xff] %v336
  $region18: #{conv_lr2.1} parent=0 // loop_footer
    %s71 = sadd.s32 1, %s67
  $region19: #{conv_lr2.1} parent=0 // loop_footer_branch
    %66 = sbr.rel target = $region15
  $region20: #{conv_lr2.1} parent=0 // loop_exit
    _
  loop: start=0, step=1, limit=7
  $region21: #{conv_lr2.1} parent=0 // loop_pre_header
    _
  $region22: #{conv_lr2.1} parent=0 // loop_header
    %s344 = sphi 0, %s348
    %p345 = scmp.ge.s32.totalorder %s344, 7
    %v349 = vphi %v72, %v566
    %v350 = vphi %v73, %v567
    %v351 = vphi %v74, %v613
    %v352 = vphi %v75, %v614
  $region23: #{conv_lr2.1} parent=0 // loop_header_branch
    %347 = sbr.rel (%p345) target = $region27
  $region24: #{conv_lr2.1} parent=0 // loop_body
    %s353 = ssub.s32 6, %s344
    %s354 = smul.u32 %s353, 4
    %s355 = smul.addr %s354, 8
    %s356 = scalar_lea.vmem %s3, %s355
    %v357 = vld [vmem:[%s356] sm:$0xff]
    %v358 = vld [vmem:[%s356 + $0x8] sm:$0xff]
    %v359 = vld [vmem:[%s356 + $0x10] sm:$0xff]
    %v360 = vld [vmem:[%s356 + $0x18] sm:$0xff]
    %v361 = vpack.c.bf16 %v349, %v349
    %v362 = vpack.c.bf16 %v350, %v350
    %v395 = vunpack.c.l.b16 %v14
    %v396 = vunpack.c.h.b16 %v14
    %v397 = vunpack.c.l.b16 %v15
    %v398 = vunpack.c.h.b16 %v15
    %v399 = vunpack.c.l.b16 %v16
    %v400 = vunpack.c.h.b16 %v16
    %v401 = vunpack.c.l.b16 %v17
    %v402 = vunpack.c.h.b16 %v17
    %v403 = vunpack.c.l.b16 %v18
    %v404 = vunpack.c.h.b16 %v18
    %v405 = vunpack.c.l.b16 %v19
    %v406 = vunpack.c.h.b16 %v19
    %v407 = vunpack.c.l.b16 %v20
    %v408 = vunpack.c.h.b16 %v20
    %v409 = vunpack.c.l.b16 %v21
    %v410 = vunpack.c.h.b16 %v21
    %v411 = vunpack.c.l.b16 %v22
    %v412 = vunpack.c.h.b16 %v22
    %v413 = vunpack.c.l.b16 %v23
    %v414 = vunpack.c.h.b16 %v23
    %v415 = vunpack.c.l.b16 %v24
    %v416 = vunpack.c.h.b16 %v24
    %v417 = vunpack.c.l.b16 %v25
    %v418 = vunpack.c.h.b16 %v25
    %v419 = vunpack.c.l.b16 %v26
    %v420 = vunpack.c.h.b16 %v26
    %v421 = vunpack.c.l.b16 %v27
    %v422 = vunpack.c.h.b16 %v27
    %v423 = vunpack.c.l.b16 %v28
    %v424 = vunpack.c.h.b16 %v28
    %v425 = vunpack.c.l.b16 %v29
    %v426 = vunpack.c.h.b16 %v29
    %v427 = vunpack.c.l.b16 %v30
    %v428 = vunpack.c.h.b16 %v30
    %v429 = vunpack.c.l.b16 %v31
    %v430 = vunpack.c.h.b16 %v31
    %v431 = vunpack.c.l.b16 %v32
    %v432 = vunpack.c.h.b16 %v32
    %v433 = vunpack.c.l.b16 %v33
    %v434 = vunpack.c.h.b16 %v33
    %v435 = vunpack.c.l.b16 %v34
    %v436 = vunpack.c.h.b16 %v34
    %v437 = vunpack.c.l.b16 %v35
    %v438 = vunpack.c.h.b16 %v35
    %v439 = vunpack.c.l.b16 %v36
    %v440 = vunpack.c.h.b16 %v36
    %v441 = vunpack.c.l.b16 %v37
    %v442 = vunpack.c.h.b16 %v37
    %v443 = vunpack.c.l.b16 %v38
    %v444 = vunpack.c.h.b16 %v38
    %v445 = vunpack.c.l.b16 %v39
    %v446 = vunpack.c.h.b16 %v39
    %v447 = vunpack.c.l.b16 %v40
    %v448 = vunpack.c.h.b16 %v40
    %v449 = vunpack.c.l.b16 %v41
    %v450 = vunpack.c.h.b16 %v41
    %v451 = vunpack.c.l.b16 %v42
    %v452 = vunpack.c.h.b16 %v42
    %v453 = vunpack.c.l.b16 %v43
    %v454 = vunpack.c.h.b16 %v43
    %v455 = vunpack.c.l.b16 %v44
    %v456 = vunpack.c.h.b16 %v44
    %v457 = vunpack.c.l.b16 %v45
    %v458 = vunpack.c.h.b16 %v45
    %v459 = vpack.c.b16 %v397, %v395
    %v460 = vpack.c.b16 %v398, %v396
    %v461 = vpack.c.b16 %v401, %v399
    %v462 = vpack.c.b16 %v402, %v400
    %v463 = vpack.c.b16 %v405, %v403
    %v464 = vpack.c.b16 %v406, %v404
    %v465 = vpack.c.b16 %v409, %v407
    %v466 = vpack.c.b16 %v410, %v408
    %v467 = vpack.c.b16 %v413, %v411
    %v468 = vpack.c.b16 %v414, %v412
    %v469 = vpack.c.b16 %v417, %v415
    %v470 = vpack.c.b16 %v418, %v416
    %v471 = vpack.c.b16 %v421, %v419
    %v472 = vpack.c.b16 %v422, %v420
    %v473 = vpack.c.b16 %v425, %v423
    %v474 = vpack.c.b16 %v426, %v424
    %v475 = vpack.c.b16 %v429, %v427
    %v476 = vpack.c.b16 %v430, %v428
    %v477 = vpack.c.b16 %v433, %v431
    %v478 = vpack.c.b16 %v434, %v432
    %v479 = vpack.c.b16 %v437, %v435
    %v480 = vpack.c.b16 %v438, %v436
    %v481 = vpack.c.b16 %v441, %v439
    %v482 = vpack.c.b16 %v442, %v440
    %v483 = vpack.c.b16 %v445, %v443
    %v484 = vpack.c.b16 %v446, %v444
    %v485 = vpack.c.b16 %v449, %v447
    %v486 = vpack.c.b16 %v450, %v448
    %v487 = vpack.c.b16 %v453, %v451
    %v488 = vpack.c.b16 %v454, %v452
    %v489 = vpack.c.b16 %v457, %v455
    %v490 = vpack.c.b16 %v458, %v456
    %523 = vmatprep.subr.bf16.mxu0 %v460
    %524 = vmatpush1.bf16.msra.mxu0 %v459
    %525 = vmatprep.subr.bf16.mxu0 %v462
    %526 = vmatpush1.bf16.msra.mxu0 %v461
    %527 = vmatprep.subr.bf16.mxu0 %v464
    %528 = vmatpush1.bf16.msra.mxu0 %v463
    %529 = vmatprep.subr.bf16.mxu0 %v466
    %530 = vmatpush1.bf16.msra.mxu0 %v465
    %531 = vmatprep.subr.bf16.mxu0 %v468
    %532 = vmatpush1.bf16.msra.mxu0 %v467
    %533 = vmatprep.subr.bf16.mxu0 %v470
    %534 = vmatpush1.bf16.msra.mxu0 %v469
    %535 = vmatprep.subr.bf16.mxu0 %v472
    %536 = vmatpush1.bf16.msra.mxu0 %v471
    %537 = vmatprep.subr.bf16.mxu0 %v474
    %538 = vmatpush1.bf16.msra.mxu0 %v473
    %539 = vmatprep.subr.bf16.mxu0 %v476
    %540 = vmatpush1.bf16.msra.mxu0 %v475
    %541 = vmatprep.subr.bf16.mxu0 %v478
    %542 = vmatpush1.bf16.msra.mxu0 %v477
    %543 = vmatprep.subr.bf16.mxu0 %v480
    %544 = vmatpush1.bf16.msra.mxu0 %v479
    %545 = vmatprep.subr.bf16.mxu0 %v482
    %546 = vmatpush1.bf16.msra.mxu0 %v481
    %547 = vmatprep.subr.bf16.mxu0 %v484
    %548 = vmatpush1.bf16.msra.mxu0 %v483
    %549 = vmatprep.subr.bf16.mxu0 %v486
    %550 = vmatpush1.bf16.msra.mxu0 %v485
    %551 = vmatprep.subr.bf16.mxu0 %v488
    %552 = vmatpush1.bf16.msra.mxu0 %v487
    %553 = vmatprep.subr.bf16.mxu0 %v490
    %554 = vmatpush1.bf16.msra.mxu0 %v489
    %555 = vmatprep.mubr.bf16.mxu0 %v362
    %556 = vmatmul.mubr.bf16.gmra.mrb[0].mxu0 %v361
    %v557 = vpop.f32.mrb[0].mxu0
    %v558 = vadd.f32 %v51, %v557
    %v559 = vpop.f32.mrb[0].mxu0
    %v560 = vadd.f32 %v55, %v559
    %v561 = vpop.f32.mrb[0].mxu0
    %v562 = vpop.f32.mrb[0].mxu0
    %563 = vdwg.mxu0
    %v564 = vmax.f32 %v558, 0.0
    %v565 = vmax.f32 %v560, 0.0
    %v566 = vadd.f32 %v564, %v357
    %v567 = vadd.f32 %v565, %v358
    %v568 = vpack.c.bf16 %v351, %v351
    %v569 = vpack.c.bf16 %v352, %v352
    %570 = vmatprep.subr.bf16.mxu0 %v460
    %571 = vmatpush1.bf16.msra.mxu0 %v459
    %572 = vmatprep.subr.bf16.mxu0 %v462
    %573 = vmatpush1.bf16.msra.mxu0 %v461
    %574 = vmatprep.subr.bf16.mxu0 %v464
    %575 = vmatpush1.bf16.msra.mxu0 %v463
    %576 = vmatprep.subr.bf16.mxu0 %v466
    %577 = vmatpush1.bf16.msra.mxu0 %v465
    %578 = vmatprep.subr.bf16.mxu0 %v468
    %579 = vmatpush1.bf16.msra.mxu0 %v467
    %580 = vmatprep.subr.bf16.mxu0 %v470
    %581 = vmatpush1.bf16.msra.mxu0 %v469
    %582 = vmatprep.subr.bf16.mxu0 %v472
    %583 = vmatpush1.bf16.msra.mxu0 %v471
    %584 = vmatprep.subr.bf16.mxu0 %v474
    %585 = vmatpush1.bf16.msra.mxu0 %v473
    %586 = vmatprep.subr.bf16.mxu0 %v476
    %587 = vmatpush1.bf16.msra.mxu0 %v475
    %588 = vmatprep.subr.bf16.mxu0 %v478
    %589 = vmatpush1.bf16.msra.mxu0 %v477
    %590 = vmatprep.subr.bf16.mxu0 %v480
    %591 = vmatpush1.bf16.msra.mxu0 %v479
    %592 = vmatprep.subr.bf16.mxu0 %v482
    %593 = vmatpush1.bf16.msra.mxu0 %v481
    %594 = vmatprep.subr.bf16.mxu0 %v484
    %595 = vmatpush1.bf16.msra.mxu0 %v483
    %596 = vmatprep.subr.bf16.mxu0 %v486
    %597 = vmatpush1.bf16.msra.mxu0 %v485
    %598 = vmatprep.subr.bf16.mxu0 %v488
    %599 = vmatpush1.bf16.msra.mxu0 %v487
    %600 = vmatprep.subr.bf16.mxu0 %v490
    %601 = vmatpush1.bf16.msra.mxu0 %v489
    %602 = vmatprep.mubr.bf16.mxu0 %v569
    %603 = vmatmul.mubr.bf16.gmra.mrb[0].mxu0 %v568
    %v604 = vpop.f32.mrb[0].mxu0
    %v605 = vadd.f32 %v51, %v604
    %v606 = vpop.f32.mrb[0].mxu0
    %v607 = vadd.f32 %v55, %v606
    %v608 = vpop.f32.mrb[0].mxu0
    %v609 = vpop.f32.mrb[0].mxu0
    %610 = vdwg.mxu0
    %v611 = vmax.f32 %v605, 0.0
    %v612 = vmax.f32 %v607, 0.0
    %v613 = vadd.f32 %v611, %v359
    %v614 = vadd.f32 %v612, %v360
    %615 = vst [vmem:[%s356] sm:$0xff] %v566
    %616 = vst [vmem:[%s356 + $0x8] sm:$0xff] %v567
    %617 = vst [vmem:[%s356 + $0x10] sm:$0xff] %v613
    %618 = vst [vmem:[%s356 + $0x18] sm:$0xff] %v614
  $region25: #{conv_lr2.1} parent=0 // loop_footer
    %s348 = sadd.s32 1, %s344
  $region26: #{conv_lr2.1} parent=0 // loop_footer_branch
    %343 = sbr.rel target = $region22
  $region27: #{conv_lr2.1} parent=0 // loop_exit
    _
  // Predicated region
  $region28: #{conv_lr2.1} parent=0 // pred_check
    _
  $region29: #{conv_lr2.1} parent=0 // pred_check_branch
    %620 = sbr.rel (0) target = $region31
  $region30: #{conv_lr2.1} parent=0 // pred_region
    _
  $region31: #{conv_lr2.1} parent=0 // pred_fallthru
    _
  // Predicated region
  $region32: #{conv_lr2.1} parent=0 // pred_check
    _
  $region33: #{conv_lr2.1} parent=0 // pred_check_branch
    %622 = sbr.rel (0) target = $region35
  $region34: #{conv_lr2.1} parent=0 // pred_region
    _
  $region35: #{conv_lr2.1} parent=0 // pred_fallthru
    _

</llo_original>
